<compile_context>
chip_gen: v7x
topology: tpu7x:2x2x1
jax: 0.10.0
libtpu: 0.0.40
codegen_flags: <defaults>
</compile_context>

<pallas_src>
import functools

import jax
import jax.numpy as jnp
from jax.experimental import pallas as pl
from jax.experimental.pallas import tpu as pltpu

# Logical dims (matches the PyTorch FNN): 784 -> 256 -> 128 -> 10
IN_F, H1_F, H2_F, OUT_F = 784, 256, 128, 10
OUT_PAD = 128  # fc3 output padded 10 -> 128 so the store is lane-dense


def _round_up(n, m):
    return ((n + m - 1) // m) * m


def fnn_kernel(x_ref, w1_ref, b1_ref, w2_ref, b2_ref, w3_ref, b3_ref, o_ref):
    # fc1 + relu: cast the f32 x tile to bf16 in-kernel (no wrapper pass),
    # bf16 MXU matmul with f32 accumulation, bias/ReLU in f32.
    x = x_ref[...].astype(jnp.bfloat16)
    h1 = jnp.dot(x, w1_ref[...], preferred_element_type=jnp.float32)
    h1 = jnp.maximum(h1 + b1_ref[...], 0.0).astype(jnp.bfloat16)
    # fc2 + relu
    h2 = jnp.dot(h1, w2_ref[...], preferred_element_type=jnp.float32)
    h2 = jnp.maximum(h2 + b2_ref[...], 0.0).astype(jnp.bfloat16)
    # fc3 (no activation); lane-dense (tb, 128) store
    h3 = jnp.dot(h2, w3_ref[...], preferred_element_type=jnp.float32)
    o_ref[...] = (h3 + b3_ref[...]).astype(o_ref.dtype)


def pack_params(params):
    """One-time packing: (in, out) weights -> bf16, fc3 padded 10->128, f32 biases."""
    w1, b1, w2, b2, w3, b3 = params
    w1_p = jnp.asarray(w1, jnp.bfloat16)                       # (784, 256)
    w2_p = jnp.asarray(w2, jnp.bfloat16)                       # (256, 128)
    w3_p = jnp.pad(jnp.asarray(w3, jnp.float32),
                   ((0, 0), (0, OUT_PAD - OUT_F))).astype(jnp.bfloat16)  # (128, 128)
    b1_p = jnp.asarray(b1, jnp.float32).reshape(1, H1_F)
    b2_p = jnp.asarray(b2, jnp.float32).reshape(1, H2_F)
    b3_p = jnp.pad(jnp.asarray(b3, jnp.float32).reshape(1, OUT_F),
                   ((0, 0), (0, OUT_PAD - OUT_F)))
    return (w1_p, b1_p, w2_p, b2_p, w3_p, b3_p)


def _choose_tiling(B, tile_b):
    """Pick (tb, padded_B): tb multiple of 8, <= tile_b, >=2 tiles when splittable."""
    tile_b = max(8, _round_up(tile_b, 8))
    n_tiles = max(1, -(-B // tile_b))
    # v7x has 2 TensorCores: make sure a splittable batch yields >=2 parallel tiles.
    if n_tiles == 1 and B >= 16:
        n_tiles = 2
    tb = _round_up(-(-B // n_tiles), 8)
    return tb, n_tiles * tb


@functools.partial(jax.jit, static_argnames=("tile_b",))
def fnn_forward(x, packed_params, *, tile_b=1024):
    """x: any shape flattening to (B, 784). Returns (B, 10) f32 logits."""
    w1, b1, w2, b2, w3, b3 = packed_params

    x2d = x.reshape(-1, IN_F)
    B = x2d.shape[0]
    tb, b_pad = _choose_tiling(B, tile_b)
    if b_pad != B:
        # Only the (small) batch remainder is padded; no feature-dim pad/cast.
        x2d = jnp.pad(x2d, ((0, b_pad - B), (0, 0)))

    grid = (b_pad // tb,)

    def const(shape):
        # Weights / biases: same block every grid step -> stay VMEM-resident.
        return pl.BlockSpec(shape, lambda i: (0,) * len(shape))

    out = pl.pallas_call(
        fnn_kernel,
        out_shape=jax.ShapeDtypeStruct((b_pad, OUT_PAD), jnp.float32),
        grid=grid,
        in_specs=[
            pl.BlockSpec((tb, IN_F), lambda i: (i, 0)),   # x batch tile (un-padded 784)
            const((IN_F, H1_F)),                          # w1 (784, 256) bf16
            const((1, H1_F)),                             # b1
            const((H1_F, H2_F)),                          # w2 (256, 128) bf16
            const((1, H2_F)),                             # b2
            const((H2_F, OUT_PAD)),                       # w3 (128, 128) bf16, padded
            const((1, OUT_PAD)),                          # b3 padded
        ],
        out_specs=pl.BlockSpec((tb, OUT_PAD), lambda i: (i, 0)),
        compiler_params=pltpu.CompilerParams(
            dimension_semantics=("parallel",),      # shard batch tiles across TCs
            vmem_limit_bytes=32 * 1024 * 1024,      # > v5e 16 MiB default, < v7x 64 MiB
        ),
    )(x2d, w1, b1, w2, b2, w3, b3)

    # Strip batch / output-column padding.
    return out[:B, :OUT_F]


def init_params(key):
    """Deterministic init mimicking nn.Linear default U[-1/sqrt(fan_in), +]."""
    sizes = [(IN_F, H1_F), (H1_F, H2_F), (H2_F, OUT_F)]
    params = []
    for fan_in, fan_out in sizes:
        kw, kb, key = jax.random.split(key, 3)
        bound = 1.0 / (fan_in ** 0.5)
        # stored as (in, out): transpose of torch's (out, in) weight
        w = jax.random.uniform(kw, (fan_in, fan_out), jnp.float32, -bound, bound)
        b = jax.random.uniform(kb, (1, fan_out), jnp.float32, -bound, bound)
        params += [w, b]
    return tuple(params)


def _reference(x2d, params):
    w1, b1, w2, b2, w3, b3 = params
    h = jnp.maximum(x2d @ w1 + b1, 0.0)
    h = jnp.maximum(h @ w2 + b2, 0.0)
    return h @ w3 + b3


if __name__ == "__main__":
    key = jax.random.PRNGKey(0)
    kx, kp = jax.random.split(key)
    # MNIST-like input, small batch: (B, 1, 28, 28) -> flattened to (B, 784)
    x = jax.random.normal(kx, (8, 1, 28, 28), jnp.float32)
    params = init_params(kp)
    packed = pack_params(params)

    out = fnn_forward(x, packed)
    jax.block_until_ready(out)

    ref = _reference(x.reshape(-1, IN_F), params)
    assert out.shape == (8, OUT_F)
    assert jnp.allclose(out, ref, atol=3e-2, rtol=3e-2), float(
        jnp.max(jnp.abs(out - ref)))

    # Second check exercises the multi-tile grid + ragged-batch padding path.
    x2 = jax.random.normal(jax.random.PRNGKey(1), (20, IN_F), jnp.float32)
    out2 = fnn_forward(x2, packed, tile_b=8)
    jax.block_until_ready(out2)
    ref2 = _reference(x2, params)
    assert out2.shape == (20, OUT_F)
    assert jnp.allclose(out2, ref2, atol=3e-2, rtol=3e-2), float(
        jnp.max(jnp.abs(out2 - ref2)))

    print("KERNEL_OK")
</pallas_src>

<mosaic_0001>
module attributes {stable_mosaic.version = 11 : i64} {
  func.func @fnn_kernel(%arg0: i32, %arg1: memref<8x784xf32, #tpu.memory_space<vmem>>, %arg2: memref<784x256xbf16, #tpu.memory_space<vmem>>, %arg3: memref<1x256xf32, #tpu.memory_space<vmem>>, %arg4: memref<256x128xbf16, #tpu.memory_space<vmem>>, %arg5: memref<1x128xf32, #tpu.memory_space<vmem>>, %arg6: memref<128x128xbf16, #tpu.memory_space<vmem>>, %arg7: memref<1x128xf32, #tpu.memory_space<vmem>>, %arg8: memref<8x128xf32, #tpu.memory_space<vmem>>) attributes {dimension_semantics = [#tpu.dimension_semantics<parallel>], iteration_bounds = array<i64: 1>, scalar_prefetch = 0 : i64, scratch_operands = 0 : i64, tpu.core_type = #tpu.core_type<tc>, window_params = [{transform_indices = @transform_0, window_bounds = array<i64: 8, 784>}, {pipeline_mode = #tpu.pipeline_mode<synchronous>, transform_indices = @transform_1, window_bounds = array<i64: 784, 256>}, {pipeline_mode = #tpu.pipeline_mode<synchronous>, transform_indices = @transform_2, window_bounds = array<i64: 1, 256>}, {pipeline_mode = #tpu.pipeline_mode<synchronous>, transform_indices = @transform_3, window_bounds = array<i64: 256, 128>}, {pipeline_mode = #tpu.pipeline_mode<synchronous>, transform_indices = @transform_4, window_bounds = array<i64: 1, 128>}, {pipeline_mode = #tpu.pipeline_mode<synchronous>, transform_indices = @transform_5, window_bounds = array<i64: 128, 128>}, {pipeline_mode = #tpu.pipeline_mode<synchronous>, transform_indices = @transform_6, window_bounds = array<i64: 1, 128>}, {transform_indices = @transform_7, window_bounds = array<i64: 8, 128>}]} {
    %c0 = arith.constant 0 : index
    %c0_0 = arith.constant 0 : index
    %0 = vector.load %arg1[%c0, %c0_0] : memref<8x784xf32, #tpu.memory_space<vmem>>, vector<8x784xf32>
    %1 = arith.truncf %0 : vector<8x784xf32> to vector<8x784xbf16>
    %c0_1 = arith.constant 0 : index
    %c0_2 = arith.constant 0 : index
    %2 = vector.load %arg2[%c0_1, %c0_2] : memref<784x256xbf16, #tpu.memory_space<vmem>>, vector<784x256xbf16>
    %cst = arith.constant dense<0.000000e+00> : vector<8x256xf32>
    %3 = tpu.matmul %1, %2, %cst {dimension_numbers = #tpu.dot_dimension_numbers<[1], [0], [0], [1], [0, 0, 1, 1], [], []>} : vector<8x784xbf16>, vector<784x256xbf16>, vector<8x256xf32> -> vector<8x256xf32>
    %c0_3 = arith.constant 0 : index
    %c0_4 = arith.constant 0 : index
    %4 = vector.load %arg3[%c0_3, %c0_4] : memref<1x256xf32, #tpu.memory_space<vmem>>, vector<1x256xf32>
    %5 = vector.broadcast %4 : vector<1x256xf32> to vector<8x256xf32>
    %6 = arith.addf %3, %5 : vector<8x256xf32>
    %cst_5 = arith.constant 0.000000e+00 : f32
    %7 = vector.broadcast %cst_5 : f32 to vector<8x256xf32>
    %8 = arith.maximumf %6, %7 : vector<8x256xf32>
    %9 = arith.truncf %8 : vector<8x256xf32> to vector<8x256xbf16>
    %c0_6 = arith.constant 0 : index
    %c0_7 = arith.constant 0 : index
    %10 = vector.load %arg4[%c0_6, %c0_7] : memref<256x128xbf16, #tpu.memory_space<vmem>>, vector<256x128xbf16>
    %cst_8 = arith.constant dense<0.000000e+00> : vector<8x128xf32>
    %11 = tpu.matmul %9, %10, %cst_8 {dimension_numbers = #tpu.dot_dimension_numbers<[1], [0], [0], [1], [0, 0, 1, 1], [], []>} : vector<8x256xbf16>, vector<256x128xbf16>, vector<8x128xf32> -> vector<8x128xf32>
    %c0_9 = arith.constant 0 : index
    %c0_10 = arith.constant 0 : index
    %12 = vector.load %arg5[%c0_9, %c0_10] : memref<1x128xf32, #tpu.memory_space<vmem>>, vector<1x128xf32>
    %13 = vector.broadcast %12 : vector<1x128xf32> to vector<8x128xf32>
    %14 = arith.addf %11, %13 : vector<8x128xf32>
    %cst_11 = arith.constant 0.000000e+00 : f32
    %15 = vector.broadcast %cst_11 : f32 to vector<8x128xf32>
    %16 = arith.maximumf %14, %15 : vector<8x128xf32>
    %17 = arith.truncf %16 : vector<8x128xf32> to vector<8x128xbf16>
    %c0_12 = arith.constant 0 : index
    %c0_13 = arith.constant 0 : index
    %18 = vector.load %arg6[%c0_12, %c0_13] : memref<128x128xbf16, #tpu.memory_space<vmem>>, vector<128x128xbf16>
    %cst_14 = arith.constant dense<0.000000e+00> : vector<8x128xf32>
    %19 = tpu.matmul %17, %18, %cst_14 {dimension_numbers = #tpu.dot_dimension_numbers<[1], [0], [0], [1], [0, 0, 1, 1], [], []>} : vector<8x128xbf16>, vector<128x128xbf16>, vector<8x128xf32> -> vector<8x128xf32>
    %c0_15 = arith.constant 0 : index
    %c0_16 = arith.constant 0 : index
    %20 = vector.load %arg7[%c0_15, %c0_16] : memref<1x128xf32, #tpu.memory_space<vmem>>, vector<1x128xf32>
    %21 = vector.broadcast %20 : vector<1x128xf32> to vector<8x128xf32>
    %22 = arith.addf %19, %21 : vector<8x128xf32>
    %c0_17 = arith.constant 0 : index
    %c0_18 = arith.constant 0 : index
    %23 = vector.load %arg8[%c0_17, %c0_18] : memref<8x128xf32, #tpu.memory_space<vmem>>, vector<8x128xf32>
    tpu.vector_store %arg8[%c0_17, %c0_18], %22 {strides = array<i32>} : memref<8x128xf32, #tpu.memory_space<vmem>>, vector<8x128xf32>,
    return
  }
  func.func @transform_0(%arg0: i32) -> (i32, i32) {
    %c0_i32 = arith.constant 0 : i32
    %c0_i32_0 = arith.constant 0 : i32
    return %arg0, %c0_i32 : i32, i32
  }
  func.func @transform_1(%arg0: i32) -> (i32, i32) {
    %c0_i32 = arith.constant 0 : i32
    %c0_i32_0 = arith.constant 0 : i32
    %c0_i32_1 = arith.constant 0 : i32
    return %c0_i32, %c0_i32_0 : i32, i32
  }
  func.func @transform_2(%arg0: i32) -> (i32, i32) {
    %c0_i32 = arith.constant 0 : i32
    %c0_i32_0 = arith.constant 0 : i32
    %c0_i32_1 = arith.constant 0 : i32
    return %c0_i32, %c0_i32_0 : i32, i32
  }
  func.func @transform_3(%arg0: i32) -> (i32, i32) {
    %c0_i32 = arith.constant 0 : i32
    %c0_i32_0 = arith.constant 0 : i32
    %c0_i32_1 = arith.constant 0 : i32
    return %c0_i32, %c0_i32_0 : i32, i32
  }
  func.func @transform_4(%arg0: i32) -> (i32, i32) {
    %c0_i32 = arith.constant 0 : i32
    %c0_i32_0 = arith.constant 0 : i32
    %c0_i32_1 = arith.constant 0 : i32
    return %c0_i32, %c0_i32_0 : i32, i32
  }
  func.func @transform_5(%arg0: i32) -> (i32, i32) {
    %c0_i32 = arith.constant 0 : i32
    %c0_i32_0 = arith.constant 0 : i32
    %c0_i32_1 = arith.constant 0 : i32
    return %c0_i32, %c0_i32_0 : i32, i32
  }
  func.func @transform_6(%arg0: i32) -> (i32, i32) {
    %c0_i32 = arith.constant 0 : i32
    %c0_i32_0 = arith.constant 0 : i32
    %c0_i32_1 = arith.constant 0 : i32
    return %c0_i32, %c0_i32_0 : i32, i32
  }
  func.func @transform_7(%arg0: i32) -> (i32, i32) {
    %c0_i32 = arith.constant 0 : i32
    %c0_i32_0 = arith.constant 0 : i32
    return %arg0, %c0_i32 : i32, i32
  }
}

</mosaic_0001>

<llo_original>
// kernel: fnn_forward.1
$region0: #{fnn_forward.1}
  #allocation0 [shape = 'u32[]', space=smem, size = 0x4, offset = 0x4, fixed_abs, tag = 'smem constant byte address 0x4 - core index']
  #allocation1 [shape = 'u32[144,128]{1,0:T(1,128)}', space=vmem, size = 0x12000, scoped, tag = 'internal scratch']
  %s0 = inlined_call_operand.vmem [shape: f32[8,784], index: 0, kind: input, shape index: {}]
  %s1 = inlined_call_operand.vmem [shape: bf16[784,256], index: 1, kind: input, shape index: {}]
  %s2 = inlined_call_operand.vmem [shape: f32[1,256], index: 2, kind: input, shape index: {}]
  %s3 = inlined_call_operand.hbm [shape: bf16[256,128], index: 3, kind: input, shape index: {}]
  %s4 = inlined_call_operand.vmem [shape: f32[1,128], index: 4, kind: input, shape index: {}]
  %s5 = inlined_call_operand.hbm [shape: bf16[128,128], index: 5, kind: input, shape index: {}]
  %s6 = inlined_call_operand.vmem [shape: f32[1,128], index: 6, kind: input, shape index: {}]
  %s7 = inlined_call_operand.hbm [shape: f32[8,128], index: 7, kind: output, shape index: {}]
  %s8 = sld [smem:[#allocation0]]
  $region46: #{fnn_forward.1} parent=0
    _
  %s10 = ssub.s32 1, %s8
  %s11 = scalar_select 0, %s10, %s8
  $region1: #{fnn_forward.1} parent=0
    #allocation2 [shape = 'u8[65536]{0}', space=vmem, size = 0x10000, scoped, tag = 'input window, operand 3, single buffered']
    #allocation3 [shape = 's32[1]{0}', space=sflag, size = 0x4, scoped, tag = 'scoped memory for fnn_forward.1']
    #allocation4 [shape = 's32[1]{0}', space=sflag, size = 0x4, scoped, tag = 'scoped memory for fnn_forward.1']
    #allocation5 [shape = 'u8[32768]{0}', space=vmem, size = 0x8000, scoped, tag = 'input window, operand 5, single buffered']
    #allocation6 [shape = 's32[1]{0}', space=sflag, size = 0x4, scoped, tag = 'scoped memory for fnn_forward.1']
    #allocation7 [shape = 'u8[4096]{0}', space=vmem, size = 0x1000, scoped, tag = 'output window, operand 0, single buffered']
    %12 = vsyncpa [#allocation3], 0
    %13 = vsyncpa [#allocation6], 0
    %14 = vsyncpa [#allocation4], 0
    // Predicated region
    $region2: #{fnn_forward.1} parent=1 // pred_check
      _
    $region3: #{fnn_forward.1} parent=1 // pred_check_branch
      %16 = sbr.rel (0) target = $region5
    $region4: #{fnn_forward.1} parent=1 // pred_region
      _
    $region5: #{fnn_forward.1} parent=1 // pred_fallthru
      _
    // Predicated region
    $region6: #{fnn_forward.1} parent=1 // pred_check
      _
    $region7: #{fnn_forward.1} parent=1 // pred_check_branch
      %18 = sbr.rel (0) target = $region9
    $region8: #{fnn_forward.1} parent=1 // pred_region
      _
    $region9: #{fnn_forward.1} parent=1 // pred_fallthru
      _
    // Predicated region
    $region10: #{fnn_forward.1} parent=1 // pred_check
      _
    $region11: #{fnn_forward.1} parent=1 // pred_check_branch
      %20 = sbr.rel (0) target = $region13
    $region12: #{fnn_forward.1} parent=1 // pred_region
      _
    $region13: #{fnn_forward.1} parent=1 // pred_fallthru
      _
    // Predicated region
    $region14: #{fnn_forward.1} parent=1 // pred_check
      _
    $region15: #{fnn_forward.1} parent=1 // pred_check_branch
      %22 = sbr.rel (0) target = $region17
    $region16: #{fnn_forward.1} parent=1 // pred_region
      %s24 = ssub.s32 2048, 2048
      %25 = vsyncadd [#allocation3], %s24
      %s26 = sshll.u32 [#allocation2], 4
      %s27 = int_to_ptr.vmem [resolvable:$true] %s26
      %32 = dma.hbm_to_vmem [thread:$0]  %s3, 2048, %s27, [#allocation3], 64, 64, 4
    $region17: #{fnn_forward.1} parent=1 // pred_fallthru
      _
    // Predicated region
    $region18: #{fnn_forward.1} parent=1 // pred_check
      _
    $region19: #{fnn_forward.1} parent=1 // pred_check_branch
      %34 = sbr.rel (0) target = $region21
    $region20: #{fnn_forward.1} parent=1 // pred_region
      _
    $region21: #{fnn_forward.1} parent=1 // pred_fallthru
      _
    // Predicated region
    $region22: #{fnn_forward.1} parent=1 // pred_check
      _
    $region23: #{fnn_forward.1} parent=1 // pred_check_branch
      %36 = sbr.rel (0) target = $region25
    $region24: #{fnn_forward.1} parent=1 // pred_region
      %s38 = ssub.s32 1024, 1024
      %39 = vsyncadd [#allocation6], %s38
      %s40 = sshll.u32 [#allocation5], 4
      %s41 = int_to_ptr.vmem [resolvable:$true] %s40
      %46 = dma.hbm_to_vmem [thread:$0]  %s5, 1024, %s41, [#allocation6], 64, 64, 4
    $region25: #{fnn_forward.1} parent=1 // pred_fallthru
      _
    // Predicated region
    $region26: #{fnn_forward.1} parent=1 // pred_check
      _
    $region27: #{fnn_forward.1} parent=1 // pred_check_branch
      %48 = sbr.rel (0) target = $region29
    $region28: #{fnn_forward.1} parent=1 // pred_region
      _
    $region29: #{fnn_forward.1} parent=1 // pred_fallthru
      _
    // Predicated region
    $region30: #{fnn_forward.1} parent=1 // pred_check
      _
    $region31: #{fnn_forward.1} parent=1 // pred_check_branch
      %50 = sbr.rel (0) target = $region33
    $region32: #{fnn_forward.1} parent=1 // pred_region
      %51 = dma.done [#allocation3], 2048
    $region33: #{fnn_forward.1} parent=1 // pred_fallthru
      _
    // Predicated region
    $region34: #{fnn_forward.1} parent=1 // pred_check
      _
    $region35: #{fnn_forward.1} parent=1 // pred_check_branch
      %53 = sbr.rel (0) target = $region37
    $region36: #{fnn_forward.1} parent=1 // pred_region
      %54 = dma.done [#allocation6], 1024
    $region37: #{fnn_forward.1} parent=1 // pred_fallthru
      _
    %v56 = vld [vmem:[%s0] sm:$0xff]
    %v57 = vld [vmem:[%s0 + $0x8] sm:$0xff]
    %v58 = vld [vmem:[%s0 + $0x10] sm:$0xff]
    %v59 = vld [vmem:[%s0 + $0x18] sm:$0xff]
    %v60 = vld [vmem:[%s0 + $0x20] sm:$0xff]
    %v61 = vld [vmem:[%s0 + $0x28] sm:$0xff]
    %v62 = vld [vmem:[%s0 + $0x30] sm:$0xff]
    %v63 = vpack.c.bf16 %v56, %v56
    %v64 = vpack.c.bf16 %v57, %v57
    %v65 = vpack.c.bf16 %v58, %v58
    %v66 = vpack.c.bf16 %v59, %v59
    %v67 = vpack.c.bf16 %v60, %v60
    %v68 = vpack.c.bf16 %v61, %v61
    %v69 = vpack.c.bf16 %v62, %v62
    %v70 = vld [vmem:[%s1] sm:$0xff]
    %v71 = vld [vmem:[%s1 + $0x8] sm:$0xff]
    %v72 = vld [vmem:[%s1 + $0x10] sm:$0xff]
    %v73 = vld [vmem:[%s1 + $0x18] sm:$0xff]
    %v74 = vld [vmem:[%s1 + $0x20] sm:$0xff]
    %v75 = vld [vmem:[%s1 + $0x28] sm:$0xff]
    %v76 = vld [vmem:[%s1 + $0x30] sm:$0xff]
    %v77 = vld [vmem:[%s1 + $0x38] sm:$0xff]
    %v78 = vld [vmem:[%s1 + $0x40] sm:$0xff]
    %v79 = vld [vmem:[%s1 + $0x48] sm:$0xff]
    %v80 = vld [vmem:[%s1 + $0x50] sm:$0xff]
    %v81 = vld [vmem:[%s1 + $0x58] sm:$0xff]
    %v82 = vld [vmem:[%s1 + $0x60] sm:$0xff]
    %v83 = vld [vmem:[%s1 + $0x68] sm:$0xff]
    %v84 = vld [vmem:[%s1 + $0x70] sm:$0xff]
    %v85 = vld [vmem:[%s1 + $0x78] sm:$0xff]
    %v86 = vld [vmem:[%s1 + $0x80] sm:$0xff]
    %v87 = vld [vmem:[%s1 + $0x88] sm:$0xff]
    %v88 = vld [vmem:[%s1 + $0x90] sm:$0xff]
    %v89 = vld [vmem:[%s1 + $0x98] sm:$0xff]
    %v90 = vld [vmem:[%s1 + $0xa0] sm:$0xff]
    %v91 = vld [vmem:[%s1 + $0xa8] sm:$0xff]
    %v92 = vld [vmem:[%s1 + $0xb0] sm:$0xff]
    %v93 = vld [vmem:[%s1 + $0xb8] sm:$0xff]
    %v94 = vld [vmem:[%s1 + $0xc0] sm:$0xff]
    %v95 = vld [vmem:[%s1 + $0xc8] sm:$0xff]
    %v96 = vld [vmem:[%s1 + $0xd0] sm:$0xff]
    %v97 = vld [vmem:[%s1 + $0xd8] sm:$0xff]
    %v98 = vld [vmem:[%s1 + $0xe0] sm:$0xff]
    %v99 = vld [vmem:[%s1 + $0xe8] sm:$0xff]
    %v100 = vld [vmem:[%s1 + $0xf0] sm:$0xff]
    %v101 = vld [vmem:[%s1 + $0xf8] sm:$0xff]
    %v102 = vld [vmem:[%s1 + $0x100] sm:$0xff]
    %v103 = vld [vmem:[%s1 + $0x108] sm:$0xff]
    %v104 = vld [vmem:[%s1 + $0x110] sm:$0xff]
    %v105 = vld [vmem:[%s1 + $0x118] sm:$0xff]
    %v106 = vld [vmem:[%s1 + $0x120] sm:$0xff]
    %v107 = vld [vmem:[%s1 + $0x128] sm:$0xff]
    %v108 = vld [vmem:[%s1 + $0x130] sm:$0xff]
    %v109 = vld [vmem:[%s1 + $0x138] sm:$0xff]
    %v110 = vld [vmem:[%s1 + $0x140] sm:$0xff]
    %v111 = vld [vmem:[%s1 + $0x148] sm:$0xff]
    %v112 = vld [vmem:[%s1 + $0x150] sm:$0xff]
    %v113 = vld [vmem:[%s1 + $0x158] sm:$0xff]
    %v114 = vld [vmem:[%s1 + $0x160] sm:$0xff]
    %v115 = vld [vmem:[%s1 + $0x168] sm:$0xff]
    %v116 = vld [vmem:[%s1 + $0x170] sm:$0xff]
    %v117 = vld [vmem:[%s1 + $0x178] sm:$0xff]
    %v118 = vld [vmem:[%s1 + $0x180] sm:$0xff]
    %v119 = vld [vmem:[%s1 + $0x188] sm:$0xff]
    %v120 = vld [vmem:[%s1 + $0x190] sm:$0xff]
    %v121 = vld [vmem:[%s1 + $0x198] sm:$0xff]
    %v122 = vld [vmem:[%s1 + $0x1a0] sm:$0xff]
    %v123 = vld [vmem:[%s1 + $0x1a8] sm:$0xff]
    %v124 = vld [vmem:[%s1 + $0x1b0] sm:$0xff]
    %v125 = vld [vmem:[%s1 + $0x1b8] sm:$0xff]
    %v126 = vld [vmem:[%s1 + $0x1c0] sm:$0xff]
    %v127 = vld [vmem:[%s1 + $0x1c8] sm:$0xff]
    %v128 = vld [vmem:[%s1 + $0x1d0] sm:$0xff]
    %v129 = vld [vmem:[%s1 + $0x1d8] sm:$0xff]
    %v130 = vld [vmem:[%s1 + $0x1e0] sm:$0xff]
    %v131 = vld [vmem:[%s1 + $0x1e8] sm:$0xff]
    %v132 = vld [vmem:[%s1 + $0x1f0] sm:$0xff]
    %v133 = vld [vmem:[%s1 + $0x1f8] sm:$0xff]
    %v134 = vld [vmem:[%s1 + $0x200] sm:$0xff]
    %v135 = vld [vmem:[%s1 + $0x208] sm:$0xff]
    %v136 = vld [vmem:[%s1 + $0x210] sm:$0xff]
    %v137 = vld [vmem:[%s1 + $0x218] sm:$0xff]
    %v138 = vld [vmem:[%s1 + $0x220] sm:$0xff]
    %v139 = vld [vmem:[%s1 + $0x228] sm:$0xff]
    %v140 = vld [vmem:[%s1 + $0x230] sm:$0xff]
    %v141 = vld [vmem:[%s1 + $0x238] sm:$0xff]
    %v142 = vld [vmem:[%s1 + $0x240] sm:$0xff]
    %v143 = vld [vmem:[%s1 + $0x248] sm:$0xff]
    %v144 = vld [vmem:[%s1 + $0x250] sm:$0xff]
    %v145 = vld [vmem:[%s1 + $0x258] sm:$0xff]
    %v146 = vld [vmem:[%s1 + $0x260] sm:$0xff]
    %v147 = vld [vmem:[%s1 + $0x268] sm:$0xff]
    %v148 = vld [vmem:[%s1 + $0x270] sm:$0xff]
    %v149 = vld [vmem:[%s1 + $0x278] sm:$0xff]
    %v150 = vld [vmem:[%s1 + $0x280] sm:$0xff]
    %v151 = vld [vmem:[%s1 + $0x288] sm:$0xff]
    %v152 = vld [vmem:[%s1 + $0x290] sm:$0xff]
    %v153 = vld [vmem:[%s1 + $0x298] sm:$0xff]
    %v154 = vld [vmem:[%s1 + $0x2a0] sm:$0xff]
    %v155 = vld [vmem:[%s1 + $0x2a8] sm:$0xff]
    %v156 = vld [vmem:[%s1 + $0x2b0] sm:$0xff]
    %v157 = vld [vmem:[%s1 + $0x2b8] sm:$0xff]
    %v158 = vld [vmem:[%s1 + $0x2c0] sm:$0xff]
    %v159 = vld [vmem:[%s1 + $0x2c8] sm:$0xff]
    %v160 = vld [vmem:[%s1 + $0x2d0] sm:$0xff]
    %v161 = vld [vmem:[%s1 + $0x2d8] sm:$0xff]
    %v162 = vld [vmem:[%s1 + $0x2e0] sm:$0xff]
    %v163 = vld [vmem:[%s1 + $0x2e8] sm:$0xff]
    %v164 = vld [vmem:[%s1 + $0x2f0] sm:$0xff]
    %v165 = vld [vmem:[%s1 + $0x2f8] sm:$0xff]
    %v166 = vld [vmem:[%s1 + $0x300] sm:$0xff]
    %v167 = vld [vmem:[%s1 + $0x308] sm:$0xff]
    %v168 = vld [vmem:[%s2] sm:$0x3]
    %v170 = vlaneseq
    %v171 = vshrl.u32 %v170, 7
    %v172 = vsub.s32 0, %v171
    %v173 = vrot.slane %v168, %v172
    %v174 = vlaneseq
    %v175 = vshrl.u32 %v174, 7
    %v176 = vsub.s32 1, %v175
    %v177 = vrot.slane %v168, %v176
    %v278 = vunpack.c.l.b16 %v70
    %v279 = vunpack.c.h.b16 %v70
    %v280 = vunpack.c.l.b16 %v71
    %v281 = vunpack.c.h.b16 %v71
    %v282 = vunpack.c.l.b16 %v72
    %v283 = vunpack.c.h.b16 %v72
    %v284 = vunpack.c.l.b16 %v73
    %v285 = vunpack.c.h.b16 %v73
    %v286 = vunpack.c.l.b16 %v74
    %v287 = vunpack.c.h.b16 %v74
    %v288 = vunpack.c.l.b16 %v75
    %v289 = vunpack.c.h.b16 %v75
    %v290 = vunpack.c.l.b16 %v76
    %v291 = vunpack.c.h.b16 %v76
    %v292 = vunpack.c.l.b16 %v77
    %v293 = vunpack.c.h.b16 %v77
    %v294 = vunpack.c.l.b16 %v78
    %v295 = vunpack.c.h.b16 %v78
    %v296 = vunpack.c.l.b16 %v79
    %v297 = vunpack.c.h.b16 %v79
    %v298 = vunpack.c.l.b16 %v80
    %v299 = vunpack.c.h.b16 %v80
    %v300 = vunpack.c.l.b16 %v81
    %v301 = vunpack.c.h.b16 %v81
    %v302 = vunpack.c.l.b16 %v82
    %v303 = vunpack.c.h.b16 %v82
    %v304 = vunpack.c.l.b16 %v83
    %v305 = vunpack.c.h.b16 %v83
    %v306 = vunpack.c.l.b16 %v84
    %v307 = vunpack.c.h.b16 %v84
    %v308 = vunpack.c.l.b16 %v85
    %v309 = vunpack.c.h.b16 %v85
    %v310 = vunpack.c.l.b16 %v86
    %v311 = vunpack.c.h.b16 %v86
    %v312 = vunpack.c.l.b16 %v87
    %v313 = vunpack.c.h.b16 %v87
    %v314 = vunpack.c.l.b16 %v88
    %v315 = vunpack.c.h.b16 %v88
    %v316 = vunpack.c.l.b16 %v89
    %v317 = vunpack.c.h.b16 %v89
    %v318 = vunpack.c.l.b16 %v90
    %v319 = vunpack.c.h.b16 %v90
    %v320 = vunpack.c.l.b16 %v91
    %v321 = vunpack.c.h.b16 %v91
    %v322 = vunpack.c.l.b16 %v92
    %v323 = vunpack.c.h.b16 %v92
    %v324 = vunpack.c.l.b16 %v93
    %v325 = vunpack.c.h.b16 %v93
    %v326 = vunpack.c.l.b16 %v94
    %v327 = vunpack.c.h.b16 %v94
    %v328 = vunpack.c.l.b16 %v95
    %v329 = vunpack.c.h.b16 %v95
    %v330 = vunpack.c.l.b16 %v96
    %v331 = vunpack.c.h.b16 %v96
    %v332 = vunpack.c.l.b16 %v97
    %v333 = vunpack.c.h.b16 %v97
    %v334 = vunpack.c.l.b16 %v98
    %v335 = vunpack.c.h.b16 %v98
    %v336 = vunpack.c.l.b16 %v99
    %v337 = vunpack.c.h.b16 %v99
    %v338 = vunpack.c.l.b16 %v100
    %v339 = vunpack.c.h.b16 %v100
    %v340 = vunpack.c.l.b16 %v101
    %v341 = vunpack.c.h.b16 %v101
    %v342 = vunpack.c.l.b16 %v102
    %v343 = vunpack.c.h.b16 %v102
    %v344 = vunpack.c.l.b16 %v103
    %v345 = vunpack.c.h.b16 %v103
    %v346 = vunpack.c.l.b16 %v104
    %v347 = vunpack.c.h.b16 %v104
    %v348 = vunpack.c.l.b16 %v105
    %v349 = vunpack.c.h.b16 %v105
    %v350 = vunpack.c.l.b16 %v106
    %v351 = vunpack.c.h.b16 %v106
    %v352 = vunpack.c.l.b16 %v107
    %v353 = vunpack.c.h.b16 %v107
    %v354 = vunpack.c.l.b16 %v108
    %v355 = vunpack.c.h.b16 %v108
    %v356 = vunpack.c.l.b16 %v109
    %v357 = vunpack.c.h.b16 %v109
    %v358 = vunpack.c.l.b16 %v110
    %v359 = vunpack.c.h.b16 %v110
    %v360 = vunpack.c.l.b16 %v111
    %v361 = vunpack.c.h.b16 %v111
    %v362 = vunpack.c.l.b16 %v112
    %v363 = vunpack.c.h.b16 %v112
    %v364 = vunpack.c.l.b16 %v113
    %v365 = vunpack.c.h.b16 %v113
    %v366 = vunpack.c.l.b16 %v114
    %v367 = vunpack.c.h.b16 %v114
    %v368 = vunpack.c.l.b16 %v115
    %v369 = vunpack.c.h.b16 %v115
    %v370 = vunpack.c.l.b16 %v116
    %v371 = vunpack.c.h.b16 %v116
    %v372 = vunpack.c.l.b16 %v117
    %v373 = vunpack.c.h.b16 %v117
    %v374 = vunpack.c.l.b16 %v118
    %v375 = vunpack.c.h.b16 %v118
    %v376 = vunpack.c.l.b16 %v119
    %v377 = vunpack.c.h.b16 %v119
    %v378 = vunpack.c.l.b16 %v120
    %v379 = vunpack.c.h.b16 %v120
    %v380 = vunpack.c.l.b16 %v121
    %v381 = vunpack.c.h.b16 %v121
    %v382 = vunpack.c.l.b16 %v122
    %v383 = vunpack.c.h.b16 %v122
    %v384 = vunpack.c.l.b16 %v123
    %v385 = vunpack.c.h.b16 %v123
    %v386 = vunpack.c.l.b16 %v124
    %v387 = vunpack.c.h.b16 %v124
    %v388 = vunpack.c.l.b16 %v125
    %v389 = vunpack.c.h.b16 %v125
    %v390 = vunpack.c.l.b16 %v126
    %v391 = vunpack.c.h.b16 %v126
    %v392 = vunpack.c.l.b16 %v127
    %v393 = vunpack.c.h.b16 %v127
    %v394 = vunpack.c.l.b16 %v128
    %v395 = vunpack.c.h.b16 %v128
    %v396 = vunpack.c.l.b16 %v129
    %v397 = vunpack.c.h.b16 %v129
    %v398 = vunpack.c.l.b16 %v130
    %v399 = vunpack.c.h.b16 %v130
    %v400 = vunpack.c.l.b16 %v131
    %v401 = vunpack.c.h.b16 %v131
    %v402 = vunpack.c.l.b16 %v132
    %v403 = vunpack.c.h.b16 %v132
    %v404 = vunpack.c.l.b16 %v133
    %v405 = vunpack.c.h.b16 %v133
    %v406 = vunpack.c.l.b16 %v134
    %v407 = vunpack.c.h.b16 %v134
    %v408 = vunpack.c.l.b16 %v135
    %v409 = vunpack.c.h.b16 %v135
    %v410 = vunpack.c.l.b16 %v136
    %v411 = vunpack.c.h.b16 %v136
    %v412 = vunpack.c.l.b16 %v137
    %v413 = vunpack.c.h.b16 %v137
    %v414 = vunpack.c.l.b16 %v138
    %v415 = vunpack.c.h.b16 %v138
    %v416 = vunpack.c.l.b16 %v139
    %v417 = vunpack.c.h.b16 %v139
    %v418 = vunpack.c.l.b16 %v140
    %v419 = vunpack.c.h.b16 %v140
    %v420 = vunpack.c.l.b16 %v141
    %v421 = vunpack.c.h.b16 %v141
    %v422 = vunpack.c.l.b16 %v142
    %v423 = vunpack.c.h.b16 %v142
    %v424 = vunpack.c.l.b16 %v143
    %v425 = vunpack.c.h.b16 %v143
    %v426 = vunpack.c.l.b16 %v144
    %v427 = vunpack.c.h.b16 %v144
    %v428 = vunpack.c.l.b16 %v145
    %v429 = vunpack.c.h.b16 %v145
    %v430 = vunpack.c.l.b16 %v146
    %v431 = vunpack.c.h.b16 %v146
    %v432 = vunpack.c.l.b16 %v147
    %v433 = vunpack.c.h.b16 %v147
    %v434 = vunpack.c.l.b16 %v148
    %v435 = vunpack.c.h.b16 %v148
    %v436 = vunpack.c.l.b16 %v149
    %v437 = vunpack.c.h.b16 %v149
    %v438 = vunpack.c.l.b16 %v150
    %v439 = vunpack.c.h.b16 %v150
    %v440 = vunpack.c.l.b16 %v151
    %v441 = vunpack.c.h.b16 %v151
    %v442 = vunpack.c.l.b16 %v152
    %v443 = vunpack.c.h.b16 %v152
    %v444 = vunpack.c.l.b16 %v153
    %v445 = vunpack.c.h.b16 %v153
    %v446 = vunpack.c.l.b16 %v154
    %v447 = vunpack.c.h.b16 %v154
    %v448 = vunpack.c.l.b16 %v155
    %v449 = vunpack.c.h.b16 %v155
    %v450 = vunpack.c.l.b16 %v156
    %v451 = vunpack.c.h.b16 %v156
    %v452 = vunpack.c.l.b16 %v157
    %v453 = vunpack.c.h.b16 %v157
    %v454 = vunpack.c.l.b16 %v158
    %v455 = vunpack.c.h.b16 %v158
    %v456 = vunpack.c.l.b16 %v159
    %v457 = vunpack.c.h.b16 %v159
    %v458 = vunpack.c.l.b16 %v160
    %v459 = vunpack.c.h.b16 %v160
    %v460 = vunpack.c.l.b16 %v161
    %v461 = vunpack.c.h.b16 %v161
    %v462 = vunpack.c.l.b16 %v162
    %v463 = vunpack.c.h.b16 %v162
    %v464 = vunpack.c.l.b16 %v163
    %v465 = vunpack.c.h.b16 %v163
    %v466 = vunpack.c.l.b16 %v164
    %v467 = vunpack.c.h.b16 %v164
    %v468 = vunpack.c.l.b16 %v165
    %v469 = vunpack.c.h.b16 %v165
    %v470 = vunpack.c.l.b16 %v166
    %v471 = vunpack.c.h.b16 %v166
    %v472 = vunpack.c.l.b16 %v167
    %v473 = vunpack.c.h.b16 %v167
    %v474 = vpack.c.b16 %v280, %v278
    %v475 = vpack.c.b16 %v281, %v279
    %v476 = vpack.c.b16 %v284, %v282
    %v477 = vpack.c.b16 %v285, %v283
    %v478 = vpack.c.b16 %v288, %v286
    %v479 = vpack.c.b16 %v289, %v287
    %v480 = vpack.c.b16 %v292, %v290
    %v481 = vpack.c.b16 %v293, %v291
    %v482 = vpack.c.b16 %v296, %v294
    %v483 = vpack.c.b16 %v297, %v295
    %v484 = vpack.c.b16 %v300, %v298
    %v485 = vpack.c.b16 %v301, %v299
    %v486 = vpack.c.b16 %v304, %v302
    %v487 = vpack.c.b16 %v305, %v303
    %v488 = vpack.c.b16 %v308, %v306
    %v489 = vpack.c.b16 %v309, %v307
    %v490 = vpack.c.b16 %v312, %v310
    %v491 = vpack.c.b16 %v313, %v311
    %v492 = vpack.c.b16 %v316, %v314
    %v493 = vpack.c.b16 %v317, %v315
    %v494 = vpack.c.b16 %v320, %v318
    %v495 = vpack.c.b16 %v321, %v319
    %v496 = vpack.c.b16 %v324, %v322
    %v497 = vpack.c.b16 %v325, %v323
    %v498 = vpack.c.b16 %v328, %v326
    %v499 = vpack.c.b16 %v329, %v327
    %v500 = vpack.c.b16 %v332, %v330
    %v501 = vpack.c.b16 %v333, %v331
    %v502 = vpack.c.b16 %v336, %v334
    %v503 = vpack.c.b16 %v337, %v335
    %v504 = vpack.c.b16 %v340, %v338
    %v505 = vpack.c.b16 %v341, %v339
    %v506 = vpack.c.b16 %v344, %v342
    %v507 = vpack.c.b16 %v345, %v343
    %v508 = vpack.c.b16 %v348, %v346
    %v509 = vpack.c.b16 %v349, %v347
    %v510 = vpack.c.b16 %v352, %v350
    %v511 = vpack.c.b16 %v353, %v351
    %v512 = vpack.c.b16 %v356, %v354
    %v513 = vpack.c.b16 %v357, %v355
    %v514 = vpack.c.b16 %v360, %v358
    %v515 = vpack.c.b16 %v361, %v359
    %v516 = vpack.c.b16 %v364, %v362
    %v517 = vpack.c.b16 %v365, %v363
    %v518 = vpack.c.b16 %v368, %v366
    %v519 = vpack.c.b16 %v369, %v367
    %v520 = vpack.c.b16 %v372, %v370
    %v521 = vpack.c.b16 %v373, %v371
    %v522 = vpack.c.b16 %v376, %v374
    %v523 = vpack.c.b16 %v377, %v375
    %v524 = vpack.c.b16 %v380, %v378
    %v525 = vpack.c.b16 %v381, %v379
    %v526 = vpack.c.b16 %v384, %v382
    %v527 = vpack.c.b16 %v385, %v383
    %v528 = vpack.c.b16 %v388, %v386
    %v529 = vpack.c.b16 %v389, %v387
    %v530 = vpack.c.b16 %v392, %v390
    %v531 = vpack.c.b16 %v393, %v391
    %v532 = vpack.c.b16 %v396, %v394
    %v533 = vpack.c.b16 %v397, %v395
    %v534 = vpack.c.b16 %v400, %v398
    %v535 = vpack.c.b16 %v401, %v399
    %v536 = vpack.c.b16 %v404, %v402
    %v537 = vpack.c.b16 %v405, %v403
    %v538 = vpack.c.b16 %v408, %v406
    %v539 = vpack.c.b16 %v409, %v407
    %v540 = vpack.c.b16 %v412, %v410
    %v541 = vpack.c.b16 %v413, %v411
    %v542 = vpack.c.b16 %v416, %v414
    %v543 = vpack.c.b16 %v417, %v415
    %v544 = vpack.c.b16 %v420, %v418
    %v545 = vpack.c.b16 %v421, %v419
    %v546 = vpack.c.b16 %v424, %v422
    %v547 = vpack.c.b16 %v425, %v423
    %v548 = vpack.c.b16 %v428, %v426
    %v549 = vpack.c.b16 %v429, %v427
    %v550 = vpack.c.b16 %v432, %v430
    %v551 = vpack.c.b16 %v433, %v431
    %v552 = vpack.c.b16 %v436, %v434
    %v553 = vpack.c.b16 %v437, %v435
    %v554 = vpack.c.b16 %v440, %v438
    %v555 = vpack.c.b16 %v441, %v439
    %v556 = vpack.c.b16 %v444, %v442
    %v557 = vpack.c.b16 %v445, %v443
    %v558 = vpack.c.b16 %v448, %v446
    %v559 = vpack.c.b16 %v449, %v447
    %v560 = vpack.c.b16 %v452, %v450
    %v561 = vpack.c.b16 %v453, %v451
    %v562 = vpack.c.b16 %v456, %v454
    %v563 = vpack.c.b16 %v457, %v455
    %v564 = vpack.c.b16 %v460, %v458
    %v565 = vpack.c.b16 %v461, %v459
    %v566 = vpack.c.b16 %v464, %v462
    %v567 = vpack.c.b16 %v465, %v463
    %v568 = vpack.c.b16 %v468, %v466
    %v569 = vpack.c.b16 %v469, %v467
    %v570 = vpack.c.b16 %v472, %v470
    %v571 = vpack.c.b16 %v473, %v471
    %vm670 = vcmask 130048
    %v672 = vsel %vm670, %v69, 0
    %674 = vmatprep.subr.bf16.mxu0 %v475
    %675 = vmatpush1.bf16.msra.mxu0 %v474
    %676 = vmatprep.subr.bf16.mxu0 %v477
    %677 = vmatpush1.bf16.msra.mxu0 %v476
    %678 = vmatprep.subr.bf16.mxu0 %v479
    %679 = vmatpush1.bf16.msra.mxu0 %v478
    %680 = vmatprep.subr.bf16.mxu0 %v481
    %681 = vmatpush1.bf16.msra.mxu0 %v480
    %682 = vmatprep.subr.bf16.mxu0 %v483
    %683 = vmatpush1.bf16.msra.mxu0 %v482
    %684 = vmatprep.subr.bf16.mxu0 %v485
    %685 = vmatpush1.bf16.msra.mxu0 %v484
    %686 = vmatprep.subr.bf16.mxu0 %v487
    %687 = vmatpush1.bf16.msra.mxu0 %v486
    %688 = vmatprep.subr.bf16.mxu0 %v489
    %689 = vmatpush1.bf16.msra.mxu0 %v488
    %690 = vmatprep.subr.bf16.mxu0 %v491
    %691 = vmatpush1.bf16.msra.mxu0 %v490
    %692 = vmatprep.subr.bf16.mxu0 %v493
    %693 = vmatpush1.bf16.msra.mxu0 %v492
    %694 = vmatprep.subr.bf16.mxu0 %v495
    %695 = vmatpush1.bf16.msra.mxu0 %v494
    %696 = vmatprep.subr.bf16.mxu0 %v497
    %697 = vmatpush1.bf16.msra.mxu0 %v496
    %698 = vmatprep.subr.bf16.mxu0 %v499
    %699 = vmatpush1.bf16.msra.mxu0 %v498
    %700 = vmatprep.subr.bf16.mxu0 %v501
    %701 = vmatpush1.bf16.msra.mxu0 %v500
    %702 = vmatprep.subr.bf16.mxu0 %v503
    %703 = vmatpush1.bf16.msra.mxu0 %v502
    %704 = vmatprep.subr.bf16.mxu0 %v505
    %705 = vmatpush1.bf16.msra.mxu0 %v504
    %706 = vmatprep.mubr.bf16.mxu0 %v64
    %707 = vmatmul.mubr.bf16.gmra.mrb[0].mxu0 %v63
    %v708 = vpop.f32.mrb[0].mxu0
    %v709 = vadd.f32 %v173, %v708
    %v710 = vpop.f32.mrb[0].mxu0
    %v711 = vadd.f32 %v177, %v710
    %v712 = vpop.f32.mrb[0].mxu0
    %v713 = vpop.f32.mrb[0].mxu0
    %714 = vdwg.mxu0
    %715 = vmatprep.subr.bf16.mxu0 %v507
    %716 = vmatpush1.bf16.msra.mxu0 %v506
    %717 = vmatprep.subr.bf16.mxu0 %v509
    %718 = vmatpush1.bf16.msra.mxu0 %v508
    %719 = vmatprep.subr.bf16.mxu0 %v511
    %720 = vmatpush1.bf16.msra.mxu0 %v510
    %721 = vmatprep.subr.bf16.mxu0 %v513
    %722 = vmatpush1.bf16.msra.mxu0 %v512
    %723 = vmatprep.subr.bf16.mxu0 %v515
    %724 = vmatpush1.bf16.msra.mxu0 %v514
    %725 = vmatprep.subr.bf16.mxu0 %v517
    %726 = vmatpush1.bf16.msra.mxu0 %v516
    %727 = vmatprep.subr.bf16.mxu0 %v519
    %728 = vmatpush1.bf16.msra.mxu0 %v518
    %729 = vmatprep.subr.bf16.mxu0 %v521
    %730 = vmatpush1.bf16.msra.mxu0 %v520
    %731 = vmatprep.subr.bf16.mxu0 %v523
    %732 = vmatpush1.bf16.msra.mxu0 %v522
    %733 = vmatprep.subr.bf16.mxu0 %v525
    %734 = vmatpush1.bf16.msra.mxu0 %v524
    %735 = vmatprep.subr.bf16.mxu0 %v527
    %736 = vmatpush1.bf16.msra.mxu0 %v526
    %737 = vmatprep.subr.bf16.mxu0 %v529
    %738 = vmatpush1.bf16.msra.mxu0 %v528
    %739 = vmatprep.subr.bf16.mxu0 %v531
    %740 = vmatpush1.bf16.msra.mxu0 %v530
    %741 = vmatprep.subr.bf16.mxu0 %v533
    %742 = vmatpush1.bf16.msra.mxu0 %v532
    %743 = vmatprep.subr.bf16.mxu0 %v535
    %744 = vmatpush1.bf16.msra.mxu0 %v534
    %745 = vmatprep.subr.bf16.mxu0 %v537
    %746 = vmatpush1.bf16.msra.mxu0 %v536
    %747 = vmatprep.mubr.bf16.mxu0 %v66
    %748 = vmatmul.mubr.bf16.gmra.mrb[0].mxu0 %v65
    %v749 = vpop.f32.mrb[0].mxu0
    %v750 = vadd.f32 %v709, %v749
    %v751 = vpop.f32.mrb[0].mxu0
    %v752 = vadd.f32 %v711, %v751
    %v753 = vpop.f32.mrb[0].mxu0
    %v754 = vpop.f32.mrb[0].mxu0
    %755 = vdwg.mxu0
    %756 = vmatprep.subr.bf16.mxu0 %v539
    %757 = vmatpush1.bf16.msra.mxu0 %v538
    %758 = vmatprep.subr.bf16.mxu0 %v541
    %759 = vmatpush1.bf16.msra.mxu0 %v540
    %760 = vmatprep.subr.bf16.mxu0 %v543
    %761 = vmatpush1.bf16.msra.mxu0 %v542
    %762 = vmatprep.subr.bf16.mxu0 %v545
    %763 = vmatpush1.bf16.msra.mxu0 %v544
    %764 = vmatprep.subr.bf16.mxu0 %v547
    %765 = vmatpush1.bf16.msra.mxu0 %v546
    %766 = vmatprep.subr.bf16.mxu0 %v549
    %767 = vmatpush1.bf16.msra.mxu0 %v548
    %768 = vmatprep.subr.bf16.mxu0 %v551
    %769 = vmatpush1.bf16.msra.mxu0 %v550
    %770 = vmatprep.subr.bf16.mxu0 %v553
    %771 = vmatpush1.bf16.msra.mxu0 %v552
    %772 = vmatprep.subr.bf16.mxu0 %v555
    %773 = vmatpush1.bf16.msra.mxu0 %v554
    %774 = vmatprep.subr.bf16.mxu0 %v557
    %775 = vmatpush1.bf16.msra.mxu0 %v556
    %776 = vmatprep.subr.bf16.mxu0 %v559
    %777 = vmatpush1.bf16.msra.mxu0 %v558
    %778 = vmatprep.subr.bf16.mxu0 %v561
    %779 = vmatpush1.bf16.msra.mxu0 %v560
    %780 = vmatprep.subr.bf16.mxu0 %v563
    %781 = vmatpush1.bf16.msra.mxu0 %v562
    %782 = vmatprep.subr.bf16.mxu0 %v565
    %783 = vmatpush1.bf16.msra.mxu0 %v564
    %784 = vmatprep.subr.bf16.mxu0 %v567
    %785 = vmatpush1.bf16.msra.mxu0 %v566
    %786 = vmatprep.subr.bf16.mxu0 %v569
    %787 = vmatpush1.bf16.msra.mxu0 %v568
    %788 = vmatprep.mubr.bf16.mxu0 %v68
    %789 = vmatmul.mubr.bf16.gmra.mrb[0].mxu0 %v67
    %v790 = vpop.f32.mrb[0].mxu0
    %v791 = vadd.f32 %v750, %v790
    %v792 = vpop.f32.mrb[0].mxu0
    %v793 = vadd.f32 %v752, %v792
    %v794 = vpop.f32.mrb[0].mxu0
    %v795 = vpop.f32.mrb[0].mxu0
    %796 = vdwg.mxu0
    %797 = vmatprep.subr.bf16.mxu0 %v571
    %798 = vmatpush1.bf16.msra.mxu0 %v570
    %799 = vmatprep.subr.bf16.mxu0 0
    %800 = vmatpush1.bf16.msra.mxu0 0
    %801 = vmatprep.subr.bf16.mxu0 0
    %802 = vmatpush1.bf16.msra.mxu0 0
    %803 = vmatprep.subr.bf16.mxu0 0
    %804 = vmatpush1.bf16.msra.mxu0 0
    %805 = vmatprep.subr.bf16.mxu0 0
    %806 = vmatpush1.bf16.msra.mxu0 0
    %807 = vmatprep.subr.bf16.mxu0 0
    %808 = vmatpush1.bf16.msra.mxu0 0
    %809 = vmatprep.subr.bf16.mxu0 0
    %810 = vmatpush1.bf16.msra.mxu0 0
    %811 = vmatprep.subr.bf16.mxu0 0
    %812 = vmatpush1.bf16.msra.mxu0 0
    %813 = vmatprep.subr.bf16.mxu0 0
    %814 = vmatpush1.bf16.msra.mxu0 0
    %815 = vmatprep.subr.bf16.mxu0 0
    %816 = vmatpush1.bf16.msra.mxu0 0
    %817 = vmatprep.subr.bf16.mxu0 0
    %818 = vmatpush1.bf16.msra.mxu0 0
    %819 = vmatprep.subr.bf16.mxu0 0
    %820 = vmatpush1.bf16.msra.mxu0 0
    %821 = vmatprep.subr.bf16.mxu0 0
    %822 = vmatpush1.bf16.msra.mxu0 0
    %823 = vmatprep.subr.bf16.mxu0 0
    %824 = vmatpush1.bf16.msra.mxu0 0
    %825 = vmatprep.subr.bf16.mxu0 0
    %826 = vmatpush1.bf16.msra.mxu0 0
    %827 = vmatprep.subr.bf16.mxu0 0
    %828 = vmatpush1.bf16.msra.mxu0 0
    %829 = vmatprep.mubr.bf16.mxu0 0
    %830 = vmatmul.mubr.bf16.gmra.mrb[0].mxu0 %v672
    %v831 = vpop.f32.mrb[0].mxu0
    %v832 = vadd.f32 %v791, %v831
    %v833 = vpop.f32.mrb[0].mxu0
    %v834 = vadd.f32 %v793, %v833
    %v835 = vpop.f32.mrb[0].mxu0
    %v836 = vpop.f32.mrb[0].mxu0
    %837 = vdwg.mxu0
    %v838 = vmax.f32 %v832, 0.0
    %v839 = vmax.f32 %v834, 0.0
    %v840 = vpack.c.bf16 %v838, %v838
    %v841 = vpack.c.bf16 %v839, %v839
    %v842 = vld [vmem:[#allocation2] sm:$0xf]
    %v843 = vld [vmem:[#allocation2 + $0x4] sm:$0xf]
    %v844 = vld [vmem:[#allocation2 + $0x8] sm:$0xf]
    %v845 = vld [vmem:[#allocation2 + $0xc] sm:$0xf]
    %v846 = vld [vmem:[#allocation2 + $0x10] sm:$0xf]
    %v847 = vld [vmem:[#allocation2 + $0x14] sm:$0xf]
    %v848 = vld [vmem:[#allocation2 + $0x18] sm:$0xf]
    %v849 = vld [vmem:[#allocation2 + $0x1c] sm:$0xf]
    %v850 = vld [vmem:[#allocation2 + $0x20] sm:$0xf]
    %v851 = vld [vmem:[#allocation2 + $0x24] sm:$0xf]
    %v852 = vld [vmem:[#allocation2 + $0x28] sm:$0xf]
    %v853 = vld [vmem:[#allocation2 + $0x2c] sm:$0xf]
    %v854 = vld [vmem:[#allocation2 + $0x30] sm:$0xf]
    %v855 = vld [vmem:[#allocation2 + $0x34] sm:$0xf]
    %v856 = vld [vmem:[#allocation2 + $0x38] sm:$0xf]
    %v857 = vld [vmem:[#allocation2 + $0x3c] sm:$0xf]
    %v858 = vld [vmem:[#allocation2 + $0x40] sm:$0xf]
    %v859 = vld [vmem:[#allocation2 + $0x44] sm:$0xf]
    %v860 = vld [vmem:[#allocation2 + $0x48] sm:$0xf]
    %v861 = vld [vmem:[#allocation2 + $0x4c] sm:$0xf]
    %v862 = vld [vmem:[#allocation2 + $0x50] sm:$0xf]
    %v863 = vld [vmem:[#allocation2 + $0x54] sm:$0xf]
    %v864 = vld [vmem:[#allocation2 + $0x58] sm:$0xf]
    %v865 = vld [vmem:[#allocation2 + $0x5c] sm:$0xf]
    %v866 = vld [vmem:[#allocation2 + $0x60] sm:$0xf]
    %v867 = vld [vmem:[#allocation2 + $0x64] sm:$0xf]
    %v868 = vld [vmem:[#allocation2 + $0x68] sm:$0xf]
    %v869 = vld [vmem:[#allocation2 + $0x6c] sm:$0xf]
    %v870 = vld [vmem:[#allocation2 + $0x70] sm:$0xf]
    %v871 = vld [vmem:[#allocation2 + $0x74] sm:$0xf]
    %v872 = vld [vmem:[#allocation2 + $0x78] sm:$0xf]
    %v873 = vld [vmem:[#allocation2 + $0x7c] sm:$0xf]
    %v874 = vld [vmem:[%s4] sm:$0x1]
    %v876 = vlaneseq
    %v877 = vshrl.u32 %v876, 7
    %v878 = vsub.s32 0, %v877
    %v879 = vrot.slane %v874, %v878
    %v913 = vunpack.c.l.b16 %v842
    %v914 = vunpack.c.l.b16 %v843
    %v915 = vunpack.c.l.b16 %v844
    %v916 = vunpack.c.l.b16 %v845
    %v917 = vunpack.c.l.b16 %v846
    %v918 = vunpack.c.l.b16 %v847
    %v919 = vunpack.c.l.b16 %v848
    %v920 = vunpack.c.l.b16 %v849
    %v921 = vunpack.c.l.b16 %v850
    %v922 = vunpack.c.l.b16 %v851
    %v923 = vunpack.c.l.b16 %v852
    %v924 = vunpack.c.l.b16 %v853
    %v925 = vunpack.c.l.b16 %v854
    %v926 = vunpack.c.l.b16 %v855
    %v927 = vunpack.c.l.b16 %v856
    %v928 = vunpack.c.l.b16 %v857
    %v929 = vunpack.c.l.b16 %v858
    %v930 = vunpack.c.l.b16 %v859
    %v931 = vunpack.c.l.b16 %v860
    %v932 = vunpack.c.l.b16 %v861
    %v933 = vunpack.c.l.b16 %v862
    %v934 = vunpack.c.l.b16 %v863
    %v935 = vunpack.c.l.b16 %v864
    %v936 = vunpack.c.l.b16 %v865
    %v937 = vunpack.c.l.b16 %v866
    %v938 = vunpack.c.l.b16 %v867
    %v939 = vunpack.c.l.b16 %v868
    %v940 = vunpack.c.l.b16 %v869
    %v941 = vunpack.c.l.b16 %v870
    %v942 = vunpack.c.l.b16 %v871
    %v943 = vunpack.c.l.b16 %v872
    %v944 = vunpack.c.l.b16 %v873
    %v945 = vpack.c.b16 %v914, %v913
    %v946 = vpack.c.b16 %v916, %v915
    %v947 = vpack.c.b16 %v918, %v917
    %v948 = vpack.c.b16 %v920, %v919
    %v949 = vpack.c.b16 %v922, %v921
    %v950 = vpack.c.b16 %v924, %v923
    %v951 = vpack.c.b16 %v926, %v925
    %v952 = vpack.c.b16 %v928, %v927
    %v953 = vpack.c.b16 %v930, %v929
    %v954 = vpack.c.b16 %v932, %v931
    %v955 = vpack.c.b16 %v934, %v933
    %v956 = vpack.c.b16 %v936, %v935
    %v957 = vpack.c.b16 %v938, %v937
    %v958 = vpack.c.b16 %v940, %v939
    %v959 = vpack.c.b16 %v942, %v941
    %v960 = vpack.c.b16 %v944, %v943
    %977 = vmatprep.subr.bf16.mxu0 0
    %978 = vmatpush1.bf16.msra.mxu0 %v945
    %979 = vmatprep.subr.bf16.mxu0 0
    %980 = vmatpush1.bf16.msra.mxu0 %v946
    %981 = vmatprep.subr.bf16.mxu0 0
    %982 = vmatpush1.bf16.msra.mxu0 %v947
    %983 = vmatprep.subr.bf16.mxu0 0
    %984 = vmatpush1.bf16.msra.mxu0 %v948
    %985 = vmatprep.subr.bf16.mxu0 0
    %986 = vmatpush1.bf16.msra.mxu0 %v949
    %987 = vmatprep.subr.bf16.mxu0 0
    %988 = vmatpush1.bf16.msra.mxu0 %v950
    %989 = vmatprep.subr.bf16.mxu0 0
    %990 = vmatpush1.bf16.msra.mxu0 %v951
    %991 = vmatprep.subr.bf16.mxu0 0
    %992 = vmatpush1.bf16.msra.mxu0 %v952
    %993 = vmatprep.subr.bf16.mxu0 0
    %994 = vmatpush1.bf16.msra.mxu0 %v953
    %995 = vmatprep.subr.bf16.mxu0 0
    %996 = vmatpush1.bf16.msra.mxu0 %v954
    %997 = vmatprep.subr.bf16.mxu0 0
    %998 = vmatpush1.bf16.msra.mxu0 %v955
    %999 = vmatprep.subr.bf16.mxu0 0
    %1000 = vmatpush1.bf16.msra.mxu0 %v956
    %1001 = vmatprep.subr.bf16.mxu0 0
    %1002 = vmatpush1.bf16.msra.mxu0 %v957
    %1003 = vmatprep.subr.bf16.mxu0 0
    %1004 = vmatpush1.bf16.msra.mxu0 %v958
    %1005 = vmatprep.subr.bf16.mxu0 0
    %1006 = vmatpush1.bf16.msra.mxu0 %v959
    %1007 = vmatprep.subr.bf16.mxu0 0
    %1008 = vmatpush1.bf16.msra.mxu0 %v960
    %1009 = vmatprep.mubr.bf16.mxu0 %v841
    %1010 = vmatmul.mubr.bf16.gmra.mrb[0].mxu0 %v840
    %v1011 = vpop.f32.mrb[0].mxu0
    %v1012 = vadd.f32 %v879, %v1011
    %v1013 = vpop.f32.mrb[0].mxu0
    %v1014 = vpop.f32.mrb[0].mxu0
    %v1015 = vpop.f32.mrb[0].mxu0
    %1016 = vdwg.mxu0
    %v1017 = vmax.f32 %v1012, 0.0
    %v1018 = vpack.c.bf16 %v1017, %v1017
    %v1019 = vld [vmem:[#allocation5] sm:$0xf]
    %v1020 = vld [vmem:[#allocation5 + $0x4] sm:$0xf]
    %v1021 = vld [vmem:[#allocation5 + $0x8] sm:$0xf]
    %v1022 = vld [vmem:[#allocation5 + $0xc] sm:$0xf]
    %v1023 = vld [vmem:[#allocation5 + $0x10] sm:$0xf]
    %v1024 = vld [vmem:[#allocation5 + $0x14] sm:$0xf]
    %v1025 = vld [vmem:[#allocation5 + $0x18] sm:$0xf]
    %v1026 = vld [vmem:[#allocation5 + $0x1c] sm:$0xf]
    %v1027 = vld [vmem:[#allocation5 + $0x20] sm:$0xf]
    %v1028 = vld [vmem:[#allocation5 + $0x24] sm:$0xf]
    %v1029 = vld [vmem:[#allocation5 + $0x28] sm:$0xf]
    %v1030 = vld [vmem:[#allocation5 + $0x2c] sm:$0xf]
    %v1031 = vld [vmem:[#allocation5 + $0x30] sm:$0xf]
    %v1032 = vld [vmem:[#allocation5 + $0x34] sm:$0xf]
    %v1033 = vld [vmem:[#allocation5 + $0x38] sm:$0xf]
    %v1034 = vld [vmem:[#allocation5 + $0x3c] sm:$0xf]
    %v1035 = vld [vmem:[%s6] sm:$0x1]
    %v1037 = vlaneseq
    %v1038 = vshrl.u32 %v1037, 7
    %v1039 = vsub.s32 0, %v1038
    %v1040 = vrot.slane %v1035, %v1039
    %v1058 = vunpack.c.l.b16 %v1019
    %v1059 = vunpack.c.l.b16 %v1020
    %v1060 = vunpack.c.l.b16 %v1021
    %v1061 = vunpack.c.l.b16 %v1022
    %v1062 = vunpack.c.l.b16 %v1023
    %v1063 = vunpack.c.l.b16 %v1024
    %v1064 = vunpack.c.l.b16 %v1025
    %v1065 = vunpack.c.l.b16 %v1026
    %v1066 = vunpack.c.l.b16 %v1027
    %v1067 = vunpack.c.l.b16 %v1028
    %v1068 = vunpack.c.l.b16 %v1029
    %v1069 = vunpack.c.l.b16 %v1030
    %v1070 = vunpack.c.l.b16 %v1031
    %v1071 = vunpack.c.l.b16 %v1032
    %v1072 = vunpack.c.l.b16 %v1033
    %v1073 = vunpack.c.l.b16 %v1034
    %v1074 = vpack.c.b16 %v1059, %v1058
    %v1075 = vpack.c.b16 %v1061, %v1060
    %v1076 = vpack.c.b16 %v1063, %v1062
    %v1077 = vpack.c.b16 %v1065, %v1064
    %v1078 = vpack.c.b16 %v1067, %v1066
    %v1079 = vpack.c.b16 %v1069, %v1068
    %v1080 = vpack.c.b16 %v1071, %v1070
    %v1081 = vpack.c.b16 %v1073, %v1072
    %1090 = vmatprep.subr.bf16.mxu0 0
    %1091 = vmatpush1.bf16.msra.mxu0 %v1074
    %1092 = vmatprep.subr.bf16.mxu0 0
    %1093 = vmatpush1.bf16.msra.mxu0 %v1075
    %1094 = vmatprep.subr.bf16.mxu0 0
    %1095 = vmatpush1.bf16.msra.mxu0 %v1076
    %1096 = vmatprep.subr.bf16.mxu0 0
    %1097 = vmatpush1.bf16.msra.mxu0 %v1077
    %1098 = vmatprep.subr.bf16.mxu0 0
    %1099 = vmatpush1.bf16.msra.mxu0 %v1078
    %1100 = vmatprep.subr.bf16.mxu0 0
    %1101 = vmatpush1.bf16.msra.mxu0 %v1079
    %1102 = vmatprep.subr.bf16.mxu0 0
    %1103 = vmatpush1.bf16.msra.mxu0 %v1080
    %1104 = vmatprep.subr.bf16.mxu0 0
    %1105 = vmatpush1.bf16.msra.mxu0 %v1081
    %1106 = vmatprep.subr.bf16.mxu0 0
    %1107 = vmatpush1.bf16.msra.mxu0 0
    %1108 = vmatprep.subr.bf16.mxu0 0
    %1109 = vmatpush1.bf16.msra.mxu0 0
    %1110 = vmatprep.subr.bf16.mxu0 0
    %1111 = vmatpush1.bf16.msra.mxu0 0
    %1112 = vmatprep.subr.bf16.mxu0 0
    %1113 = vmatpush1.bf16.msra.mxu0 0
    %1114 = vmatprep.subr.bf16.mxu0 0
    %1115 = vmatpush1.bf16.msra.mxu0 0
    %1116 = vmatprep.subr.bf16.mxu0 0
    %1117 = vmatpush1.bf16.msra.mxu0 0
    %1118 = vmatprep.subr.bf16.mxu0 0
    %1119 = vmatpush1.bf16.msra.mxu0 0
    %1120 = vmatprep.subr.bf16.mxu0 0
    %1121 = vmatpush1.bf16.msra.mxu0 0
    %1122 = vmatprep.mubr.bf16.mxu0 0
    %1123 = vmatmul.mubr.bf16.gmra.mrb[0].mxu0 %v1018
    %v1124 = vpop.f32.mrb[0].mxu0
    %v1125 = vadd.f32 %v1040, %v1124
    %v1126 = vpop.f32.mrb[0].mxu0
    %v1127 = vpop.f32.mrb[0].mxu0
    %v1128 = vpop.f32.mrb[0].mxu0
    %1129 = vdwg.mxu0
    %1130 = vst [vmem:[#allocation7] sm:$0xff] %v1125
    // Predicated region
    $region38: #{fnn_forward.1} parent=1 // pred_check
      _
    $region39: #{fnn_forward.1} parent=1 // pred_check_branch
      %1132 = sbr.rel (0) target = $region41
    $region40: #{fnn_forward.1} parent=1 // pred_region
      %s1134 = ssub.s32 128, 128
      %1135 = vsyncadd [#allocation4], %s1134
      %s1137 = sshll.u32 [#allocation7], 4
      %s1138 = int_to_ptr.vmem [resolvable:$true] %s1137
      %1140 = dma.vmem_to_hbm [thread:$0]  %s1138, 128, %s7, [#allocation4]
    $region41: #{fnn_forward.1} parent=1 // pred_fallthru
      _
    // Predicated region
    $region42: #{fnn_forward.1} parent=1 // pred_check
      _
    $region43: #{fnn_forward.1} parent=1 // pred_check_branch
      %1142 = sbr.rel (0) target = $region45
    $region44: #{fnn_forward.1} parent=1 // pred_region
      %1143 = dma.done [#allocation4], 128
    $region45: #{fnn_forward.1} parent=1 // pred_fallthru
      _
    %1144 = vsyncpa [#allocation3], 1
    %1145 = vsyncpa [#allocation6], 1
    %1146 = vsyncpa [#allocation4], 1

</llo_original>
